<compile_context>
chip_gen: v5e
topology: v5e:2x2
jax: 0.10.0
libtpu: 0.0.40
codegen_flags: <defaults>
</compile_context>

<pallas_src>
import functools

import jax
import jax.numpy as jnp
from jax.experimental import pallas as pl
from jax.experimental.pallas import tpu as pltpu


_MAX_LANE_GROUPS = 256  # caps the unrolled per-step lane-group fold (trace size)


def _round_up(x, m):
    return ((x + m - 1) // m) * m


def _dice_kernel(p_ref, t_ref, loss_ref, num_sc, den_sc, *,
                 smooth, p, tile_d, rem, needs_mask, acc_w):
    # grid = (batch blocks [parallel], feature tiles [arbitrary / reduction]).
    k = pl.program_id(1)
    nk = pl.num_programs(1)

    @pl.when(k == 0)
    def _():
        num_sc[...] = jnp.zeros_like(num_sc)
        den_sc[...] = jnp.zeros_like(den_sc)

    x = p_ref[...].astype(jnp.float32)
    y = t_ref[...].astype(jnp.float32)

    def accumulate(valid_cols):
        # Fold the (tile_n, tile_d) tile into per-lane partial sums of width
        # acc_w. Slices at lane-group boundaries are free vreg selections; the
        # folding adds are exactly the VALU work a full reduce would need, but
        # the cross-lane XLU reduce is deferred to the epilogue. Only the
        # boundary group of a ragged tail pays an iota + select; fully invalid
        # groups (HBM pad garbage) are skipped entirely.
        num_p = None
        den_p = None
        for lo in range(0, tile_d, acc_w):
            if lo >= valid_cols:
                break
            xs = x[:, lo:lo + acc_w]
            ys = y[:, lo:lo + acc_w]
            if lo + acc_w > valid_cols:  # boundary lane group -> mask the tail
                col = jax.lax.broadcasted_iota(jnp.int32, (1, acc_w), 1)
                valid = col < (valid_cols - lo)
                xs = jnp.where(valid, xs, 0.0)
                ys = jnp.where(valid, ys, 0.0)
            n_g = xs * ys
            if p == 2:                      # keep per-element work on the VPU
                d_g = xs * xs + ys * ys
            elif p == 1:
                d_g = xs + ys
            else:
                d_g = xs ** p + ys ** p     # non-integer p routes through pow
            num_p = n_g if num_p is None else num_p + n_g
            den_p = d_g if den_p is None else den_p + d_g
        num_sc[...] += num_p
        den_sc[...] += den_p

    if needs_mask:
        # Pay the ragged-tail mask only on the LAST feature tile.
        @pl.when(k < nk - 1)
        def _():
            accumulate(tile_d)

        @pl.when(k == nk - 1)
        def _():
            accumulate(rem)
    else:
        accumulate(tile_d)

    @pl.when(k == nk - 1)
    def _():
        # One cross-lane reduce per row block, only in the epilogue.
        num = jnp.sum(num_sc[...], axis=1, keepdims=True) + smooth
        den = jnp.sum(den_sc[...], axis=1, keepdims=True) + smooth
        loss_ref[...] = (1.0 - num / den).astype(loss_ref.dtype)


def binary_dice_loss(predict, target, *, smooth=1.0, p=2, reduction="mean",
                     tile_n=None, tile_d=None):
    assert predict.shape[0] == target.shape[0], \
        "predict & target batch size don't match"
    n = predict.shape[0]
    predict2d = predict.reshape(n, -1)   # matches predict.contiguous().view(N, -1)
    target2d = target.reshape(n, -1)
    d = predict2d.shape[1]

    itemsize = jnp.dtype(predict2d.dtype).itemsize
    sub = {1: 32, 2: 16, 4: 8, 8: 8}.get(itemsize, 8)

    # --- generation-aware VMEM budget (v7x: 64 MiB/TC, v5e/v6e: 128 MiB) ----
    try:
        vmem_cap = int(pltpu.get_tpu_info().vmem_capacity_bytes)
    except Exception:
        vmem_cap = 64 * 1024 * 1024        # conservative fallback (v7x-sized)
    pipeline_budget = min(vmem_cap // 2, 56 * 1024 * 1024)  # 2 inputs x 2 bufs
    per_block_budget = pipeline_budget // 4

    # --- batch (parallel) tiling --------------------------------------------
    if tile_n is None:
        if n <= 256:
            # Expose >= 2 parallel batch blocks when N allows so both v7x TCs
            # get work; tile_d grows from the byte budget to compensate.
            tile_n = _round_up(pl.cdiv(n, 2), sub) if n >= 2 * sub else n
        else:
            tile_n = 256
    else:
        tile_n = max(1, min(int(tile_n), n))
        if tile_n < n:
            tile_n = min(_round_up(tile_n, sub), n)

    # --- feature (reduction) tiling: byte budget, multiple of 128 -----------
    if d <= 128:
        tile_d = d                         # single (possibly sub-lane-width) tile
    else:
        if tile_d is None:
            budget_elems = per_block_budget // max(1, tile_n * itemsize)
            tile_d = min(budget_elems, d, _MAX_LANE_GROUPS * 128)
        else:
            tile_d = min(int(tile_d), d, _MAX_LANE_GROUPS * 128)
        # Clamp so the double-buffered footprint always fits VMEM (graceful
        # clamp instead of a compile-time VMEM failure for user tile sizes).
        max_blk_bytes = max(128 * tile_n * itemsize,
                            (int(vmem_cap * 0.7) - 4 * 1024 * 1024) // 4)
        tile_d = min(tile_d, max(128, max_blk_bytes // (tile_n * itemsize)))
        tile_d = max(128, (tile_d // 128) * 128)
    acc_w = min(128, tile_d)

    num_row_blocks = pl.cdiv(n, tile_n)
    num_feat_tiles = pl.cdiv(d, tile_d)
    needs_mask = (d % tile_d) != 0
    rem = d - (num_feat_tiles - 1) * tile_d   # valid cols in last feature tile

    # --- explicit VMEM limit: above the footprint, never full physical VMEM --
    blk_bytes = tile_n * tile_d * itemsize
    footprint = 4 * blk_bytes + 2 * tile_n * acc_w * 4 + 2 * tile_n * 4
    vmem_limit = int(min(vmem_cap * 3 // 4,
                         max(32 * 1024 * 1024,
                             int(footprint * 1.25) + (1 << 20))))

    kernel = functools.partial(
        _dice_kernel, smooth=float(smooth), p=p, tile_d=tile_d, rem=rem,
        needs_mask=needs_mask, acc_w=acc_w)

    bytes_accessed = (predict2d.size + target2d.size) * itemsize + n * 4
    cost = pl.CostEstimate(flops=6 * n * d, transcendentals=0,
                           bytes_accessed=bytes_accessed)

    per_row_loss = pl.pallas_call(
        kernel,
        out_shape=jax.ShapeDtypeStruct((n, 1), jnp.float32),
        grid_spec=pltpu.PrefetchScalarGridSpec(
            num_scalar_prefetch=0,
            grid=(num_row_blocks, num_feat_tiles),
            in_specs=[
                pl.BlockSpec((tile_n, tile_d), lambda i, k: (i, k)),
                pl.BlockSpec((tile_n, tile_d), lambda i, k: (i, k)),
            ],
            # TODO(synk): a lane-dense (1, N) output would avoid the width-1
            # masked store, but it constrains tile_n to multiples of 128; total
            # output traffic is only N*4 bytes so the win is negligible here.
            out_specs=pl.BlockSpec((tile_n, 1), lambda i, k: (i, 0)),
            scratch_shapes=[
                pltpu.VMEM((tile_n, acc_w), jnp.float32),
                pltpu.VMEM((tile_n, acc_w), jnp.float32),
            ],
        ),
        compiler_params=pltpu.CompilerParams(
            dimension_semantics=("parallel", "arbitrary"),
            vmem_limit_bytes=vmem_limit),
        cost_estimate=cost,
    )(predict2d, target2d)

    loss = per_row_loss[:, 0]   # shape (N,)
    if reduction == "mean":
        return jnp.mean(loss)
    elif reduction == "sum":
        return jnp.sum(loss)
    elif reduction == "none":
        return loss
    else:
        raise Exception("Unexpected reduction {}".format(reduction))


def _ref_loss(predict, target, smooth=1.0, p=2, reduction="mean"):
    n = predict.shape[0]
    pr = predict.reshape(n, -1).astype(jnp.float32)
    tr = target.reshape(n, -1).astype(jnp.float32)
    num = jnp.sum(pr * tr, axis=1) + smooth
    den = jnp.sum(pr ** p + tr ** p, axis=1) + smooth
    loss = 1.0 - num / den
    if reduction == "mean":
        return jnp.mean(loss)
    if reduction == "sum":
        return jnp.sum(loss)
    return loss


if __name__ == "__main__":
    key = jax.random.PRNGKey(0)
    k1, k2, k3, k4, k5, k6 = jax.random.split(key, 6)

    # Case 1: NCHW, batch=2, channels=4, spatial=16x16 (D = 1024, lane aligned).
    predict = jax.nn.sigmoid(
        jax.random.normal(k1, (2, 4, 16, 16), dtype=jnp.float32))
    target = (jax.random.uniform(k2, (2, 4, 16, 16)) > 0.5).astype(jnp.float32)
    out = jax.block_until_ready(
        binary_dice_loss(predict, target, smooth=1.0, p=2, reduction="mean"))
    ref = _ref_loss(predict, target, 1.0, 2, "mean")
    assert jnp.allclose(out, ref, rtol=1e-5, atol=1e-6), (out, ref)

    # Case 2: ragged feature axis (D = 300) with an explicit small feature tile
    # -> exercises the last-tile-only masking path; reduction='none'.
    predict2 = jax.nn.sigmoid(
        jax.random.normal(k3, (3, 3, 10, 10), dtype=jnp.float32))
    target2 = (jax.random.uniform(k4, (3, 3, 10, 10)) > 0.5).astype(jnp.float32)
    out2 = jax.block_until_ready(
        binary_dice_loss(predict2, target2, smooth=1.0, p=2,
                         reduction="none", tile_d=128))
    ref2 = _ref_loss(predict2, target2, 1.0, 2, "none")
    assert jnp.allclose(out2, ref2, rtol=1e-5, atol=1e-6), (out2, ref2)

    # Case 3: batch large enough to split into 2 parallel row blocks (ragged
    # last batch block) + ragged feature tail (D = 147); reduction='sum'.
    predict3 = jax.nn.sigmoid(
        jax.random.normal(k5, (24, 3, 7, 7), dtype=jnp.float32))
    target3 = (jax.random.uniform(k6, (24, 3, 7, 7)) > 0.5).astype(jnp.float32)
    out3 = jax.block_until_ready(
        binary_dice_loss(predict3, target3, smooth=1.0, p=2, reduction="sum"))
    ref3 = _ref_loss(predict3, target3, 1.0, 2, "sum")
    assert jnp.allclose(out3, ref3, rtol=1e-5, atol=1e-5), (out3, ref3)

    print("KERNEL_OK")
</pallas_src>

<mosaic_0001>
module attributes {stable_mosaic.version = 11 : i64} {
  func.func @_dice_kernel(%arg0: i32, %arg1: i32, %arg2: memref<2x1024xf32, #tpu.memory_space<vmem>>, %arg3: memref<2x1024xf32, #tpu.memory_space<vmem>>, %arg4: memref<2x1xf32, #tpu.memory_space<vmem>>, %arg5: memref<2x128xf32, #tpu.memory_space<vmem>>, %arg6: memref<2x128xf32, #tpu.memory_space<vmem>>) attributes {dimension_semantics = [#tpu.dimension_semantics<parallel>, #tpu.dimension_semantics<arbitrary>], iteration_bounds = array<i64: 1, 1>, scalar_prefetch = 0 : i64, scratch_operands = 2 : i64, tpu.core_type = #tpu.core_type<tc>, window_params = [{transform_indices = @transform_0, window_bounds = array<i64: 2, 1024>}, {transform_indices = @transform_1, window_bounds = array<i64: 2, 1024>}, {transform_indices = @transform_2, window_bounds = array<i64: 2, 1>}]} {
    %c0_i32 = arith.constant 0 : i32
    %0 = arith.cmpi eq, %arg1, %c0_i32 : i32
    %1 = arith.extui %0 : i1 to i32
    %c0_i32_0 = arith.constant 0 : i32
    %2 = arith.cmpi ne, %1, %c0_i32_0 : i32
    scf.if %2 {
      %cst = arith.constant 0.000000e+00 : f32
      %76 = vector.broadcast %cst : f32 to vector<2x128xf32>
      %c0_14 = arith.constant 0 : index
      %c0_15 = arith.constant 0 : index
      %77 = vector.load %arg5[%c0_14, %c0_15] : memref<2x128xf32, #tpu.memory_space<vmem>>, vector<2x128xf32>
      tpu.vector_store %arg5[%c0_14, %c0_15], %76 {strides = array<i32>} : memref<2x128xf32, #tpu.memory_space<vmem>>, vector<2x128xf32>,
      %cst_16 = arith.constant 0.000000e+00 : f32
      %78 = vector.broadcast %cst_16 : f32 to vector<2x128xf32>
      %c0_17 = arith.constant 0 : index
      %c0_18 = arith.constant 0 : index
      %79 = vector.load %arg6[%c0_17, %c0_18] : memref<2x128xf32, #tpu.memory_space<vmem>>, vector<2x128xf32>
      tpu.vector_store %arg6[%c0_17, %c0_18], %78 {strides = array<i32>} : memref<2x128xf32, #tpu.memory_space<vmem>>, vector<2x128xf32>,
    } else {
    }
    %c0 = arith.constant 0 : index
    %c0_1 = arith.constant 0 : index
    %3 = vector.load %arg2[%c0, %c0_1] : memref<2x1024xf32, #tpu.memory_space<vmem>>, vector<2x1024xf32>
    %c0_2 = arith.constant 0 : index
    %c0_3 = arith.constant 0 : index
    %4 = vector.load %arg3[%c0_2, %c0_3] : memref<2x1024xf32, #tpu.memory_space<vmem>>, vector<2x1024xf32>
    %5 = vector.extract_strided_slice %3 {offsets = [0, 0], sizes = [2, 128], strides = [1, 1]} : vector<2x1024xf32> to vector<2x128xf32>
    %6 = vector.extract_strided_slice %4 {offsets = [0, 0], sizes = [2, 128], strides = [1, 1]} : vector<2x1024xf32> to vector<2x128xf32>
    %7 = arith.mulf %5, %6 : vector<2x128xf32>
    %8 = arith.mulf %5, %5 : vector<2x128xf32>
    %9 = arith.mulf %6, %6 : vector<2x128xf32>
    %10 = arith.addf %8, %9 : vector<2x128xf32>
    %11 = vector.extract_strided_slice %3 {offsets = [0, 128], sizes = [2, 128], strides = [1, 1]} : vector<2x1024xf32> to vector<2x128xf32>
    %12 = vector.extract_strided_slice %4 {offsets = [0, 128], sizes = [2, 128], strides = [1, 1]} : vector<2x1024xf32> to vector<2x128xf32>
    %13 = arith.mulf %11, %12 : vector<2x128xf32>
    %14 = arith.mulf %11, %11 : vector<2x128xf32>
    %15 = arith.mulf %12, %12 : vector<2x128xf32>
    %16 = arith.addf %14, %15 : vector<2x128xf32>
    %17 = arith.addf %7, %13 : vector<2x128xf32>
    %18 = arith.addf %10, %16 : vector<2x128xf32>
    %19 = vector.extract_strided_slice %3 {offsets = [0, 256], sizes = [2, 128], strides = [1, 1]} : vector<2x1024xf32> to vector<2x128xf32>
    %20 = vector.extract_strided_slice %4 {offsets = [0, 256], sizes = [2, 128], strides = [1, 1]} : vector<2x1024xf32> to vector<2x128xf32>
    %21 = arith.mulf %19, %20 : vector<2x128xf32>
    %22 = arith.mulf %19, %19 : vector<2x128xf32>
    %23 = arith.mulf %20, %20 : vector<2x128xf32>
    %24 = arith.addf %22, %23 : vector<2x128xf32>
    %25 = arith.addf %17, %21 : vector<2x128xf32>
    %26 = arith.addf %18, %24 : vector<2x128xf32>
    %27 = vector.extract_strided_slice %3 {offsets = [0, 384], sizes = [2, 128], strides = [1, 1]} : vector<2x1024xf32> to vector<2x128xf32>
    %28 = vector.extract_strided_slice %4 {offsets = [0, 384], sizes = [2, 128], strides = [1, 1]} : vector<2x1024xf32> to vector<2x128xf32>
    %29 = arith.mulf %27, %28 : vector<2x128xf32>
    %30 = arith.mulf %27, %27 : vector<2x128xf32>
    %31 = arith.mulf %28, %28 : vector<2x128xf32>
    %32 = arith.addf %30, %31 : vector<2x128xf32>
    %33 = arith.addf %25, %29 : vector<2x128xf32>
    %34 = arith.addf %26, %32 : vector<2x128xf32>
    %35 = vector.extract_strided_slice %3 {offsets = [0, 512], sizes = [2, 128], strides = [1, 1]} : vector<2x1024xf32> to vector<2x128xf32>
    %36 = vector.extract_strided_slice %4 {offsets = [0, 512], sizes = [2, 128], strides = [1, 1]} : vector<2x1024xf32> to vector<2x128xf32>
    %37 = arith.mulf %35, %36 : vector<2x128xf32>
    %38 = arith.mulf %35, %35 : vector<2x128xf32>
    %39 = arith.mulf %36, %36 : vector<2x128xf32>
    %40 = arith.addf %38, %39 : vector<2x128xf32>
    %41 = arith.addf %33, %37 : vector<2x128xf32>
    %42 = arith.addf %34, %40 : vector<2x128xf32>
    %43 = vector.extract_strided_slice %3 {offsets = [0, 640], sizes = [2, 128], strides = [1, 1]} : vector<2x1024xf32> to vector<2x128xf32>
    %44 = vector.extract_strided_slice %4 {offsets = [0, 640], sizes = [2, 128], strides = [1, 1]} : vector<2x1024xf32> to vector<2x128xf32>
    %45 = arith.mulf %43, %44 : vector<2x128xf32>
    %46 = arith.mulf %43, %43 : vector<2x128xf32>
    %47 = arith.mulf %44, %44 : vector<2x128xf32>
    %48 = arith.addf %46, %47 : vector<2x128xf32>
    %49 = arith.addf %41, %45 : vector<2x128xf32>
    %50 = arith.addf %42, %48 : vector<2x128xf32>
    %51 = vector.extract_strided_slice %3 {offsets = [0, 768], sizes = [2, 128], strides = [1, 1]} : vector<2x1024xf32> to vector<2x128xf32>
    %52 = vector.extract_strided_slice %4 {offsets = [0, 768], sizes = [2, 128], strides = [1, 1]} : vector<2x1024xf32> to vector<2x128xf32>
    %53 = arith.mulf %51, %52 : vector<2x128xf32>
    %54 = arith.mulf %51, %51 : vector<2x128xf32>
    %55 = arith.mulf %52, %52 : vector<2x128xf32>
    %56 = arith.addf %54, %55 : vector<2x128xf32>
    %57 = arith.addf %49, %53 : vector<2x128xf32>
    %58 = arith.addf %50, %56 : vector<2x128xf32>
    %59 = vector.extract_strided_slice %3 {offsets = [0, 896], sizes = [2, 128], strides = [1, 1]} : vector<2x1024xf32> to vector<2x128xf32>
    %60 = vector.extract_strided_slice %4 {offsets = [0, 896], sizes = [2, 128], strides = [1, 1]} : vector<2x1024xf32> to vector<2x128xf32>
    %61 = arith.mulf %59, %60 : vector<2x128xf32>
    %62 = arith.mulf %59, %59 : vector<2x128xf32>
    %63 = arith.mulf %60, %60 : vector<2x128xf32>
    %64 = arith.addf %62, %63 : vector<2x128xf32>
    %65 = arith.addf %57, %61 : vector<2x128xf32>
    %66 = arith.addf %58, %64 : vector<2x128xf32>
    %c0_4 = arith.constant 0 : index
    %c0_5 = arith.constant 0 : index
    %67 = vector.load %arg5[%c0_4, %c0_5] : memref<2x128xf32, #tpu.memory_space<vmem>>, vector<2x128xf32>
    %68 = arith.addf %67, %65 : vector<2x128xf32>
    %c0_6 = arith.constant 0 : index
    %c0_7 = arith.constant 0 : index
    %69 = vector.load %arg5[%c0_6, %c0_7] : memref<2x128xf32, #tpu.memory_space<vmem>>, vector<2x128xf32>
    tpu.vector_store %arg5[%c0_6, %c0_7], %68 {strides = array<i32>} : memref<2x128xf32, #tpu.memory_space<vmem>>, vector<2x128xf32>,
    %c0_8 = arith.constant 0 : index
    %c0_9 = arith.constant 0 : index
    %70 = vector.load %arg6[%c0_8, %c0_9] : memref<2x128xf32, #tpu.memory_space<vmem>>, vector<2x128xf32>
    %71 = arith.addf %70, %66 : vector<2x128xf32>
    %c0_10 = arith.constant 0 : index
    %c0_11 = arith.constant 0 : index
    %72 = vector.load %arg6[%c0_10, %c0_11] : memref<2x128xf32, #tpu.memory_space<vmem>>, vector<2x128xf32>
    tpu.vector_store %arg6[%c0_10, %c0_11], %71 {strides = array<i32>} : memref<2x128xf32, #tpu.memory_space<vmem>>, vector<2x128xf32>,
    %c0_i32_12 = arith.constant 0 : i32
    %73 = arith.cmpi eq, %arg1, %c0_i32_12 : i32
    %74 = arith.extui %73 : i1 to i32
    %c0_i32_13 = arith.constant 0 : i32
    %75 = arith.cmpi ne, %74, %c0_i32_13 : i32
    scf.if %75 {
      %c0_14 = arith.constant 0 : index
      %c0_15 = arith.constant 0 : index
      %76 = vector.load %arg5[%c0_14, %c0_15] : memref<2x128xf32, #tpu.memory_space<vmem>>, vector<2x128xf32>
      %cst = arith.constant dense<0.000000e+00> : vector<2xf32>
      %77 = vector.multi_reduction <add>, %76, %cst [1] : vector<2x128xf32> to vector<2xf32>
      %78 = vector.shape_cast %77 : vector<2xf32> to vector<2x1xf32>
      %cst_16 = arith.constant 1.000000e+00 : f32
      %79 = vector.broadcast %cst_16 : f32 to vector<2x1xf32>
      %80 = arith.addf %78, %79 : vector<2x1xf32>
      %c0_17 = arith.constant 0 : index
      %c0_18 = arith.constant 0 : index
      %81 = vector.load %arg6[%c0_17, %c0_18] : memref<2x128xf32, #tpu.memory_space<vmem>>, vector<2x128xf32>
      %cst_19 = arith.constant dense<0.000000e+00> : vector<2xf32>
      %82 = vector.multi_reduction <add>, %81, %cst_19 [1] : vector<2x128xf32> to vector<2xf32>
      %83 = vector.shape_cast %82 : vector<2xf32> to vector<2x1xf32>
      %cst_20 = arith.constant 1.000000e+00 : f32
      %84 = vector.broadcast %cst_20 : f32 to vector<2x1xf32>
      %85 = arith.addf %83, %84 : vector<2x1xf32>
      %86 = arith.divf %80, %85 : vector<2x1xf32>
      %cst_21 = arith.constant 1.000000e+00 : f32
      %87 = vector.broadcast %cst_21 : f32 to vector<2x1xf32>
      %88 = arith.subf %87, %86 : vector<2x1xf32>
      %c0_22 = arith.constant 0 : index
      %c0_23 = arith.constant 0 : index
      %89 = vector.load %arg4[%c0_22, %c0_23] : memref<2x1xf32, #tpu.memory_space<vmem>>, vector<2x1xf32>
      tpu.vector_store %arg4[%c0_22, %c0_23], %88 {strides = array<i32>} : memref<2x1xf32, #tpu.memory_space<vmem>>, vector<2x1xf32>,
    } else {
    }
    return
  }
  func.func @transform_0(%arg0: i32, %arg1: i32) -> (i32, i32) {
    %c0_i32 = arith.constant 0 : i32
    return %arg0, %arg1 : i32, i32
  }
  func.func @transform_1(%arg0: i32, %arg1: i32) -> (i32, i32) {
    %c0_i32 = arith.constant 0 : i32
    return %arg0, %arg1 : i32, i32
  }
  func.func @transform_2(%arg0: i32, %arg1: i32) -> (i32, i32) {
    %c0_i32 = arith.constant 0 : i32
    %c0_i32_0 = arith.constant 0 : i32
    return %arg0, %c0_i32 : i32, i32
  }
}

</mosaic_0001>

<llo_original>
// kernel: tpu_custom_call.1
$region0: #{tpu_custom_call.1}
  #allocation0 [shape = 'u32[]', space=smem, size = 0x4, offset = 0x4, fixed_abs, tag = 'smem constant byte address 0x4 - core index']
  #allocation1 [shape = 'u32[72,128]{1,0:T(1,128)}', space=vmem, size = 0x9000, scoped, tag = 'internal scratch']
  #allocation2 [shape = 'f32[2,128]{1,0:T(2,128)}', space=vmem, size = 0x400, scoped, tag = 'scratch operand']
  #allocation3 [shape = 'f32[2,128]{1,0:T(2,128)}', space=vmem, size = 0x400, scoped, tag = 'scratch operand']
  %s0 = inlined_call_operand.hbm [shape: f32[2,1024], index: 0, kind: input, shape index: {}]
  %s1 = inlined_call_operand.hbm [shape: f32[2,1024], index: 1, kind: input, shape index: {}]
  %s2 = inlined_call_operand.vmem [shape: f32[2,1], index: 2, kind: output, shape index: {}]
  %s3 = sld [smem:[#allocation0]]
  $region34: #{tpu_custom_call.1} parent=0
    _
  %s5 = ssub.s32 1, %s3
  %s6 = scalar_select 0, %s5, %s3
  $region1: #{tpu_custom_call.1} parent=0
    #allocation4 [shape = 'u8[8192]{0}', space=vmem, size = 0x2000, scoped, tag = 'input window, operand 0, single buffered']
    #allocation5 [shape = 's32[1]{0}', space=sflag, size = 0x4, scoped, tag = 'scoped memory for tpu_custom_call.1']
    #allocation6 [shape = 'u8[8192]{0}', space=vmem, size = 0x2000, scoped, tag = 'input window, operand 1, single buffered']
    #allocation7 [shape = 's32[1]{0}', space=sflag, size = 0x4, scoped, tag = 'scoped memory for tpu_custom_call.1']
    %7 = vsyncpa [#allocation5], 0
    %8 = vsyncpa [#allocation7], 0
    // Predicated region
    $region2: #{tpu_custom_call.1} parent=1 // pred_check
      _
    $region3: #{tpu_custom_call.1} parent=1 // pred_check_branch
      %10 = sbr.rel (0) target = $region5
    $region4: #{tpu_custom_call.1} parent=1 // pred_region
      %12 = vsyncadd [#allocation5], 0
      %s14 = sshll.u32 %s0, 4
      %s15 = int_to_ptr.hbm [resolvable:$true] %s14
      %s16 = sshll.u32 [#allocation4], 4
      %s17 = int_to_ptr.vmem [resolvable:$true] %s16
      %19 = dma.hbm_to_vmem [thread:$0]  %s15, 256, %s17, [#allocation5]
    $region5: #{tpu_custom_call.1} parent=1 // pred_fallthru
      _
    // Predicated region
    $region6: #{tpu_custom_call.1} parent=1 // pred_check
      _
    $region7: #{tpu_custom_call.1} parent=1 // pred_check_branch
      %21 = sbr.rel (0) target = $region9
    $region8: #{tpu_custom_call.1} parent=1 // pred_region
      %23 = vsyncadd [#allocation7], 0
      %s25 = sshll.u32 %s1, 4
      %s26 = int_to_ptr.hbm [resolvable:$true] %s25
      %s27 = sshll.u32 [#allocation6], 4
      %s28 = int_to_ptr.vmem [resolvable:$true] %s27
      %30 = dma.hbm_to_vmem [thread:$0]  %s26, 256, %s28, [#allocation7]
    $region9: #{tpu_custom_call.1} parent=1 // pred_fallthru
      _
    // Predicated region
    $region10: #{tpu_custom_call.1} parent=1 // pred_check
      _
    $region11: #{tpu_custom_call.1} parent=1 // pred_check_branch
      %32 = sbr.rel (0) target = $region13
    $region12: #{tpu_custom_call.1} parent=1 // pred_region
      %34 = dma.done [#allocation5], 256
    $region13: #{tpu_custom_call.1} parent=1 // pred_fallthru
      _
    // Predicated region
    $region14: #{tpu_custom_call.1} parent=1 // pred_check
      _
    $region15: #{tpu_custom_call.1} parent=1 // pred_check_branch
      %36 = sbr.rel (0) target = $region17
    $region16: #{tpu_custom_call.1} parent=1 // pred_region
      %38 = dma.done [#allocation7], 256
    $region17: #{tpu_custom_call.1} parent=1 // pred_fallthru
      _
    %p39 = scmp.eq.s32.totalorder 0, 0
    // Predicated region
    $region18: #{tpu_custom_call.1} parent=1 // pred_check
      %p40 = pneg %p39
    $region19: #{tpu_custom_call.1} parent=1 // pred_check_branch
      %42 = sbr.rel (%p40) target = $region21
    $region20: #{tpu_custom_call.1} parent=1 // pred_region
      %43 = vst [vmem:[#allocation2] sm:$0x3] 0.0
      %44 = vst [vmem:[#allocation3] sm:$0x3] 0.0
    $region21: #{tpu_custom_call.1} parent=1 // pred_fallthru
      _
    %v45 = vld [vmem:[#allocation4] sm:$0xff]
    %v46 = vld [vmem:[#allocation4 + $0x8] sm:$0xff]
    %v47 = vld [vmem:[#allocation6] sm:$0xff]
    %v48 = vld [vmem:[#allocation6 + $0x8] sm:$0xff]
    %v49 = vmul.f32 %v45, %v47
    %v50 = vmul.f32 %v45, %v45
    %v51 = vmul.f32 %v47, %v47
    %v52 = vadd.f32 %v50, %v51
    %v54 = vrot.slane %v45, 2
    %v57 = vrot.slane %v47, 2
    %v59 = vmul.f32 %v54, %v57
    %v60 = vmul.f32 %v54, %v54
    %v61 = vmul.f32 %v57, %v57
    %v62 = vadd.f32 %v60, %v61
    %v63 = vadd.f32 %v49, %v59
    %v64 = vadd.f32 %v52, %v62
    %v65 = vrot.slane %v45, 4
    %v67 = vrot.slane %v47, 4
    %v69 = vmul.f32 %v65, %v67
    %v70 = vmul.f32 %v65, %v65
    %v71 = vmul.f32 %v67, %v67
    %v72 = vadd.f32 %v70, %v71
    %v73 = vadd.f32 %v63, %v69
    %v74 = vadd.f32 %v64, %v72
    %v75 = vrot.slane %v45, 6
    %v77 = vrot.slane %v47, 6
    %v79 = vmul.f32 %v75, %v77
    %v80 = vmul.f32 %v75, %v75
    %v81 = vmul.f32 %v77, %v77
    %v82 = vadd.f32 %v80, %v81
    %v83 = vadd.f32 %v73, %v79
    %v84 = vadd.f32 %v74, %v82
    %v85 = vmul.f32 %v46, %v48
    %v86 = vmul.f32 %v46, %v46
    %v87 = vmul.f32 %v48, %v48
    %v88 = vadd.f32 %v86, %v87
    %v89 = vadd.f32 %v83, %v85
    %v90 = vadd.f32 %v84, %v88
    %v92 = vrot.slane %v46, 2
    %v95 = vrot.slane %v48, 2
    %v97 = vmul.f32 %v92, %v95
    %v98 = vmul.f32 %v92, %v92
    %v99 = vmul.f32 %v95, %v95
    %v100 = vadd.f32 %v98, %v99
    %v101 = vadd.f32 %v89, %v97
    %v102 = vadd.f32 %v90, %v100
    %v103 = vrot.slane %v46, 4
    %v105 = vrot.slane %v48, 4
    %v107 = vmul.f32 %v103, %v105
    %v108 = vmul.f32 %v103, %v103
    %v109 = vmul.f32 %v105, %v105
    %v110 = vadd.f32 %v108, %v109
    %v111 = vadd.f32 %v101, %v107
    %v112 = vadd.f32 %v102, %v110
    %v113 = vrot.slane %v46, 6
    %v115 = vrot.slane %v48, 6
    %v117 = vmul.f32 %v113, %v115
    %v118 = vmul.f32 %v113, %v113
    %v119 = vmul.f32 %v115, %v115
    %v120 = vadd.f32 %v118, %v119
    %v121 = vadd.f32 %v111, %v117
    %v122 = vadd.f32 %v112, %v120
    %v123 = vld [vmem:[#allocation2] sm:$0x3]
    %v124 = vadd.f32 %v123, %v121
    %125 = vst [vmem:[#allocation2] sm:$0x3] %v124
    %v126 = vld [vmem:[#allocation3] sm:$0x3]
    %v127 = vadd.f32 %v126, %v122
    %128 = vst [vmem:[#allocation3] sm:$0x3] %v127
    // Predicated region
    $region22: #{tpu_custom_call.1} parent=1 // pred_check
      %p129 = pneg %p39
    $region23: #{tpu_custom_call.1} parent=1 // pred_check_branch
      %131 = sbr.rel (%p129) target = $region25
    $region24: #{tpu_custom_call.1} parent=1 // pred_region
      %v132 = vld [vmem:[#allocation2] sm:$0x3]
      %vm133 = vcmask 1041408
      %v134 = vsel %vm133, %v132, 0.0
      %135 = vadd.xlane.f32.xlu0 %v134
      %v136 = vpop.xlane.xlu0 %135
      %v137 = vadd.f32 %v136, 1.0
      %v138 = vld [vmem:[#allocation3] sm:$0x3]
      %v139 = vsel %vm133, %v138, 0.0
      %140 = vadd.xlane.f32.xlu0 %v139
      %v141 = vpop.xlane.xlu0 %140
      %v142 = vadd.f32 %v141, 1.0
      %v143 = vrcp.pop %v142
      %v144 = vmul.f32 %v142, %v143
      %v145 = vsub.f32 1.0, %v144
      %v146 = vmul.f32 %v143, %v145
      %v147 = vadd.f32 %v143, %v146
      %vm148 = vweird.f32 %v142
      %vm149 = vweird.f32 %v143
      %vm150 = vmor %vm148, %vm149
      %v151 = vsel %vm150, %v143, %v147
      %v152 = vand.u32 2147483647, %v142
      %vm153 = vcmp.eq.f32.partialorder %v152, 8.507059e+37
      %v154 = vand.u32 %v142, 2147483648
      %v155 = vor.u32 1.1754944e-38, %v154
      %v156 = vsel %vm153, %v155, %v151
      %v157 = vmul.f32 %v137, %v156
      %v158 = vsub.f32 1.0, %v157
      %vm159 = vcmask 1024
      %160 = vst.msk [vmem:[%s2] sm:$0x3] %vm159, %v158
    $region25: #{tpu_custom_call.1} parent=1 // pred_fallthru
      _
    // Predicated region
    $region26: #{tpu_custom_call.1} parent=1 // pred_check
      _
    $region27: #{tpu_custom_call.1} parent=1 // pred_check_branch
      %162 = sbr.rel (0) target = $region29
    $region28: #{tpu_custom_call.1} parent=1 // pred_region
      _
    $region29: #{tpu_custom_call.1} parent=1 // pred_fallthru
      _
    // Predicated region
    $region30: #{tpu_custom_call.1} parent=1 // pred_check
      _
    $region31: #{tpu_custom_call.1} parent=1 // pred_check_branch
      %164 = sbr.rel (0) target = $region33
    $region32: #{tpu_custom_call.1} parent=1 // pred_region
      _
    $region33: #{tpu_custom_call.1} parent=1 // pred_fallthru
      _
    %165 = vsyncpa [#allocation5], 1
    %166 = vsyncpa [#allocation7], 1

</llo_original>
